<compile_context>
chip_gen: v7x
topology: tpu7x:2x2x1
jax: 0.10.0
libtpu: 0.0.40
codegen_flags: <defaults>
</compile_context>

<pallas_src>
import functools

import jax
import jax.numpy as jnp
from jax import lax
from jax.experimental import pallas as pl
from jax.experimental.pallas import tpu as pltpu

_LANE = 128
_NEG_INIT = -1e30        # init value of the per-lane running max
_SELF_MASK = -1e30       # logit assigned to self-contrast entries
_PAD_COL_MARKER = -1e9   # anchor-side marker; padded contrast columns end up
                         # with logit == -1e9, whose exp underflows to 0.


def _round_up(x, m):
    return (x + m - 1) // m * m


def _supcon_kernel(row_lab_ref, col_lab_ref, a_ref, c_ref, loss_ref,
                   m_sc, z_sc, ps_sc, pc_sc, *,
                   loss_scale, n_anchor, tm, tn):
    i = pl.program_id(0)          # anchor-row tile   ("parallel")
    j = pl.program_id(1)          # contrast-col tile ("arbitrary", reduction)
    n_slices = tn // _LANE

    @pl.when(j == 0)
    def _init():
        m_sc[...] = jnp.full_like(m_sc, _NEG_INIT)
        z_sc[...] = jnp.zeros_like(z_sc)
        ps_sc[...] = jnp.zeros_like(ps_sc)
        pc_sc[...] = jnp.zeros_like(pc_sc)

    # logits tile: 1/temperature is already folded into a_ref by the wrapper.
    # bf16 operands, f32 accumulation on the MXU; contract dim 1 of both
    # operands (no explicit transpose of the contrast tile).
    s = lax.dot_general(a_ref[...], c_ref[...], (((1,), (1,)), ((), ())),
                        preferred_element_type=jnp.float32)      # (tm, tn)

    # positive-pair mask from the (encoded) labels; padded rows/cols carry
    # sentinel labels that never match, so no column-validity compare needed.
    label_eq = row_lab_ref[...] == col_lab_ref[...]               # (tm, tn)

    def _accumulate(s_eff, pos):
        # Per-lane online softmax-denominator + positive sums.  Only
        # element-wise VPU/EUP ops over static lane-aligned 128-wide slices;
        # no cross-lane movement, no per-element rescale exp:
        #   z_new = z*exp(m_old-m_new) + exp(s-m_new)
        # and exactly one of the two exps is exp(0)=1, so a single
        # exp(-|s-m_old|) plus a select suffices.
        for k in range(n_slices):
            sl = slice(k * _LANE, (k + 1) * _LANE)
            s_k = s_eff[:, sl]                                    # (tm, 128)
            p_k = pos[:, sl]
            m_old = m_sc[...]
            z_old = z_sc[...]
            m_new = jnp.maximum(m_old, s_k)
            d = jnp.exp(jnp.minimum(m_old, s_k) - m_new)          # exp(-|s-m|)
            z_sc[...] = jnp.where(s_k > m_old, z_old * d + 1.0, z_old + d)
            m_sc[...] = m_new
            ps_sc[...] = ps_sc[...] + p_k * s_k
            pc_sc[...] = pc_sc[...] + p_k

    row_start = i * tm
    col_start = j * tn
    # Does this tile intersect the self-contrast diagonal?
    is_diag = jnp.logical_and(row_start < col_start + tn,
                              col_start < row_start + tm)

    @pl.when(is_diag)
    def _diag_tile():
        row_ids = row_start + lax.broadcasted_iota(jnp.int32, (tm, 1), 0)
        col_ids = col_start + lax.broadcasted_iota(jnp.int32, (1, tn), 1)
        not_self = row_ids != col_ids
        s_eff = jnp.where(not_self, s, _SELF_MASK)   # drop self from exp-sum/max
        pos = jnp.where(jnp.logical_and(label_eq, not_self), 1.0, 0.0)
        _accumulate(s_eff, pos)

    @pl.when(jnp.logical_not(is_diag))
    def _plain_tile():
        pos = jnp.where(label_eq, 1.0, 0.0)
        _accumulate(s, pos)

    @pl.when(j == pl.num_programs(1) - 1)
    def _finalize():
        # Single cross-lane fold per row tile (off the hot path).
        m_lane = m_sc[...]                                        # (tm, 128)
        m_row = jnp.max(m_lane, axis=1, keepdims=True)            # (tm, 1)
        z_row = jnp.sum(z_sc[...] * jnp.exp(m_lane - m_row),
                        axis=1, keepdims=True)
        ps_row = jnp.sum(ps_sc[...], axis=1, keepdims=True)
        pc_row = jnp.sum(pc_sc[...], axis=1, keepdims=True)

        log_z = jnp.log(z_row) + m_row
        pc_safe = jnp.maximum(pc_row, 1.0)           # guard rows w/o positives
        mean_log_prob_pos = ps_row / pc_safe - log_z # exact divide (finalize)
        per_row = loss_scale * mean_log_prob_pos

        row_ids = row_start + lax.broadcasted_iota(jnp.int32, (tm, 1), 0)
        valid = jnp.logical_and(row_ids < n_anchor, pc_row > 0.0)
        loss_ref[...] = jnp.where(valid, per_row, 0.0)


def supcon_loss(features, labels=None, mask=None, *, temperature=0.07,
                contrast_mode='all', base_temperature=0.07,
                block_rows=512, block_cols=512,
                compute_dtype=jnp.bfloat16):
    """JAX/Pallas port of SupConLoss.forward (forward semantics only)."""
    if features.ndim < 3:
        raise ValueError('`features` needs to be [bsz, n_views, ...]')
    if features.ndim > 3:
        features = features.reshape(features.shape[0], features.shape[1], -1)
    bsz, n_views, dim = features.shape

    # ---- labels -> per-sample class ids (mask is rebuilt in-kernel) --------
    if labels is not None and mask is not None:
        raise ValueError('Cannot define both `labels` and `mask`')
    elif labels is None and mask is None:
        base_labels = jnp.arange(bsz, dtype=jnp.int32)   # == eye(bsz) mask
    elif labels is not None:
        labels = jnp.asarray(labels).reshape(-1)
        if labels.shape[0] != bsz:
            raise ValueError('Num of labels does not match num of features')
        base_labels = labels.astype(jnp.int32)
    else:
        # TODO(synk): arbitrary user-supplied [bsz, bsz] masks need a tiled
        # mask-input kernel variant; only label / SimCLR forms are kernelized.
        raise NotImplementedError('explicit `mask` argument not supported')

    # contrast_feature = cat(unbind(features, 1), 0) : [n_views*bsz, D]
    contrast_feature = jnp.transpose(features, (1, 0, 2)).reshape(
        n_views * bsz, dim)
    col_labels = jnp.tile(base_labels, n_views)

    if contrast_mode == 'one':
        anchor_feature = features[:, 0]
        row_labels = base_labels
    elif contrast_mode == 'all':
        anchor_feature = contrast_feature
        row_labels = col_labels
    else:
        raise ValueError('Unknown mode: {}'.format(contrast_mode))

    n_anchor = anchor_feature.shape[0]
    n_contrast = n_views * bsz

    # ---- tile selection -----------------------------------------------------
    block_rows = max(8, _round_up(block_rows, 8))
    block_cols = max(_LANE, _round_up(block_cols, _LANE))
    if n_anchor >= 2 * block_rows:
        tm = block_rows
    elif n_anchor >= 16:
        # keep >= 2 row tiles so the "parallel" axis can use both TensorCores
        # on megacore parts (v7x).
        tm = _round_up((n_anchor + 1) // 2, 8)
    else:
        tm = _round_up(max(n_anchor, 1), 8)
    n_a_pad = _round_up(n_anchor, tm)

    if n_contrast >= block_cols:
        tn = block_cols
        n_c_pad = _round_up(n_contrast, tn)
    else:
        n_c_pad = _round_up(n_contrast, _LANE)
        tn = n_c_pad

    has_col_pad = n_c_pad > n_contrast
    d_pad = _round_up(dim + 1, _LANE) if has_col_pad else _round_up(dim, _LANE)

    # ---- build padded / encoded operands (cheap O(N*D) wrapper ops) --------
    inv_temp = 1.0 / float(temperature)
    anchor_scaled = anchor_feature.astype(jnp.float32) * inv_temp  # fold 1/T
    a_p = jnp.zeros((n_a_pad, d_pad), jnp.float32)
    a_p = a_p.at[:n_anchor, :dim].set(anchor_scaled)
    c_p = jnp.zeros((n_c_pad, d_pad), jnp.float32)
    c_p = c_p.at[:n_contrast, :dim].set(contrast_feature.astype(jnp.float32))
    if has_col_pad:
        # Padded contrast columns: logit == (-1e9) * 1, so exp underflows to
        # exactly 0 -> no in-kernel column-validity mask required.
        a_p = a_p.at[:, dim].set(_PAD_COL_MARKER)
        c_p = c_p.at[n_contrast:, dim].set(1.0)
    a_p = a_p.astype(compute_dtype)
    c_p = c_p.astype(compute_dtype)

    # Labels: real labels encoded as 2*L (even); padded rows/cols get distinct
    # odd sentinels so they can never register as positives.
    row_lab = jnp.full((n_a_pad,), 1, jnp.int32).at[:n_anchor].set(
        2 * row_labels)
    col_lab = jnp.full((n_c_pad,), 3, jnp.int32).at[:n_contrast].set(
        2 * col_labels)
    row_lab = row_lab.reshape(n_a_pad, 1)
    col_lab = col_lab.reshape(1, n_c_pad)

    kernel = functools.partial(
        _supcon_kernel,
        loss_scale=-(float(temperature) / float(base_temperature)),
        n_anchor=n_anchor, tm=tm, tn=tn)

    # VMEM budget: double-buffered feature tiles + per-lane accumulators +
    # (tm, tn) f32 temporaries, with 2x headroom, capped for v7x's 64 MiB.
    itemsize = jnp.dtype(compute_dtype).itemsize
    est = (2 * (tm + tn) * d_pad * itemsize      # double-buffered input tiles
           + 2 * (tm + tn) * 4                   # label tiles
           + 4 * tm * _LANE * 4                  # scratch accumulators
           + 8 * tm * tn * 4)                    # logits / mask temporaries
    vmem_limit = int(min(64 * 2**20, max(32 * 2**20, 2 * est)))

    per_row = pl.pallas_call(
        kernel,
        out_shape=jax.ShapeDtypeStruct((n_a_pad, 1), jnp.float32),
        grid_spec=pltpu.PrefetchScalarGridSpec(
            num_scalar_prefetch=0,
            grid=(n_a_pad // tm, n_c_pad // tn),
            in_specs=[
                pl.BlockSpec((tm, 1), lambda i, j: (i, 0)),       # row labels
                pl.BlockSpec((1, tn), lambda i, j: (0, j)),       # col labels
                pl.BlockSpec((tm, d_pad), lambda i, j: (i, 0)),   # anchor tile
                pl.BlockSpec((tn, d_pad), lambda i, j: (j, 0)),   # contrast tile
            ],
            out_specs=pl.BlockSpec((tm, 1), lambda i, j: (i, 0)),
            scratch_shapes=[pltpu.VMEM((tm, _LANE), jnp.float32)] * 4,
        ),
        compiler_params=pltpu.CompilerParams(
            dimension_semantics=("parallel", "arbitrary"),
            vmem_limit_bytes=vmem_limit,
        ),
    )(row_lab, col_lab, a_p, c_p)

    # Padded rows (and rows with zero positive pairs, which would be NaN in
    # the PyTorch reference) contribute 0; mean over the n_anchor real anchors
    # (== loss.view(anchor_count, bsz).mean() in the reference).
    return jnp.sum(per_row) / n_anchor


def _reference_supcon(features, labels, temperature=0.07, base_temperature=0.07):
    """Pure-JAX reference (torch-equivalent) for sanity checking."""
    bsz, n_views, dim = features.shape
    labels = labels.reshape(-1, 1)
    base_mask = (labels == labels.T).astype(jnp.float32)
    contrast_feature = jnp.transpose(features, (1, 0, 2)).reshape(
        n_views * bsz, dim)
    anchor_feature = contrast_feature
    n = n_views * bsz
    logits = anchor_feature @ contrast_feature.T / temperature
    logits = logits - jnp.max(logits, axis=1, keepdims=True)
    full_mask = jnp.tile(base_mask, (n_views, n_views))
    logits_mask = 1.0 - jnp.eye(n, dtype=jnp.float32)
    full_mask = full_mask * logits_mask
    exp_logits = jnp.exp(logits) * logits_mask
    log_prob = logits - jnp.log(exp_logits.sum(1, keepdims=True))
    mean_log_prob_pos = (full_mask * log_prob).sum(1) / full_mask.sum(1)
    loss = -(temperature / base_temperature) * mean_log_prob_pos
    return loss.mean()


if __name__ == "__main__":
    key = jax.random.PRNGKey(0)
    k1, k2 = jax.random.split(key)

    bsz, n_views, dim = 8, 2, 32
    features = jax.random.normal(k1, (bsz, n_views, dim), dtype=jnp.float32)
    # L2-normalize features (standard for SupCon usage)
    features = features / jnp.linalg.norm(features, axis=-1, keepdims=True)
    labels = jax.random.randint(k2, (bsz,), 0, 3)

    ref = _reference_supcon(features, labels)

    # f32-operand path: tight check of the tiling / masking / online-softmax.
    loss_f32 = supcon_loss(features, labels=labels, compute_dtype=jnp.float32)
    loss_f32 = jax.block_until_ready(loss_f32)
    assert jnp.isfinite(loss_f32), loss_f32
    assert jnp.allclose(loss_f32, ref, atol=1e-2, rtol=1e-2), (loss_f32, ref)

    # default bf16-operand fast path (f32 MXU accumulation); looser tolerance
    # covers the bf16 input quantization.
    loss_bf16 = supcon_loss(features, labels=labels)
    loss_bf16 = jax.block_until_ready(loss_bf16)
    assert jnp.isfinite(loss_bf16), loss_bf16
    assert jnp.allclose(loss_bf16, ref, atol=3e-2, rtol=3e-2), (loss_bf16, ref)

    print("KERNEL_OK")
</pallas_src>

<mosaic_0001>
module attributes {stable_mosaic.version = 11 : i64} {
  func.func @_supcon_kernel(%arg0: i32, %arg1: i32, %arg2: memref<8x1xi32, #tpu.memory_space<vmem>>, %arg3: memref<1x128xi32, #tpu.memory_space<vmem>>, %arg4: memref<8x128xf32, #tpu.memory_space<vmem>>, %arg5: memref<128x128xf32, #tpu.memory_space<vmem>>, %arg6: memref<8x1xf32, #tpu.memory_space<vmem>>, %arg7: memref<8x128xf32, #tpu.memory_space<vmem>>, %arg8: memref<8x128xf32, #tpu.memory_space<vmem>>, %arg9: memref<8x128xf32, #tpu.memory_space<vmem>>, %arg10: memref<8x128xf32, #tpu.memory_space<vmem>>) attributes {dimension_semantics = [#tpu.dimension_semantics<parallel>, #tpu.dimension_semantics<arbitrary>], iteration_bounds = array<i64: 2, 1>, scalar_prefetch = 0 : i64, scratch_operands = 4 : i64, tpu.core_type = #tpu.core_type<tc>, window_params = [{transform_indices = @transform_0, window_bounds = array<i64: 8, 1>}, {transform_indices = @transform_1, window_bounds = array<i64: 1, 128>}, {transform_indices = @transform_2, window_bounds = array<i64: 8, 128>}, {transform_indices = @transform_3, window_bounds = array<i64: 128, 128>}, {transform_indices = @transform_4, window_bounds = array<i64: 8, 1>}]} {
    %c0_i32 = arith.constant 0 : i32
    %0 = arith.cmpi eq, %arg1, %c0_i32 : i32
    %1 = arith.extui %0 : i1 to i32
    %c0_i32_0 = arith.constant 0 : i32
    %2 = arith.cmpi ne, %1, %c0_i32_0 : i32
    scf.if %2 {
      %cst_14 = arith.constant -1.000000e+30 : f32
      %26 = vector.broadcast %cst_14 : f32 to vector<8x128xf32>
      %c0_15 = arith.constant 0 : index
      %c0_16 = arith.constant 0 : index
      %27 = vector.load %arg7[%c0_15, %c0_16] : memref<8x128xf32, #tpu.memory_space<vmem>>, vector<8x128xf32>
      tpu.vector_store %arg7[%c0_15, %c0_16], %26 {strides = array<i32>} : memref<8x128xf32, #tpu.memory_space<vmem>>, vector<8x128xf32>,
      %cst_17 = arith.constant 0.000000e+00 : f32
      %28 = vector.broadcast %cst_17 : f32 to vector<8x128xf32>
      %c0_18 = arith.constant 0 : index
      %c0_19 = arith.constant 0 : index
      %29 = vector.load %arg8[%c0_18, %c0_19] : memref<8x128xf32, #tpu.memory_space<vmem>>, vector<8x128xf32>
      tpu.vector_store %arg8[%c0_18, %c0_19], %28 {strides = array<i32>} : memref<8x128xf32, #tpu.memory_space<vmem>>, vector<8x128xf32>,
      %cst_20 = arith.constant 0.000000e+00 : f32
      %30 = vector.broadcast %cst_20 : f32 to vector<8x128xf32>
      %c0_21 = arith.constant 0 : index
      %c0_22 = arith.constant 0 : index
      %31 = vector.load %arg9[%c0_21, %c0_22] : memref<8x128xf32, #tpu.memory_space<vmem>>, vector<8x128xf32>
      tpu.vector_store %arg9[%c0_21, %c0_22], %30 {strides = array<i32>} : memref<8x128xf32, #tpu.memory_space<vmem>>, vector<8x128xf32>,
      %cst_23 = arith.constant 0.000000e+00 : f32
      %32 = vector.broadcast %cst_23 : f32 to vector<8x128xf32>
      %c0_24 = arith.constant 0 : index
      %c0_25 = arith.constant 0 : index
      %33 = vector.load %arg10[%c0_24, %c0_25] : memref<8x128xf32, #tpu.memory_space<vmem>>, vector<8x128xf32>
      tpu.vector_store %arg10[%c0_24, %c0_25], %32 {strides = array<i32>} : memref<8x128xf32, #tpu.memory_space<vmem>>, vector<8x128xf32>,
    } else {
    }
    %c0 = arith.constant 0 : index
    %c0_1 = arith.constant 0 : index
    %3 = vector.load %arg4[%c0, %c0_1] : memref<8x128xf32, #tpu.memory_space<vmem>>, vector<8x128xf32>
    %c0_2 = arith.constant 0 : index
    %c0_3 = arith.constant 0 : index
    %4 = vector.load %arg5[%c0_2, %c0_3] : memref<128x128xf32, #tpu.memory_space<vmem>>, vector<128x128xf32>
    %cst = arith.constant dense<0.000000e+00> : vector<8x128xf32>
    %5 = tpu.matmul %3, %4, %cst {dimension_numbers = #tpu.dot_dimension_numbers<[1], [1], [0], [0], [0, 0, 1, 0], [], []>} : vector<8x128xf32>, vector<128x128xf32>, vector<8x128xf32> -> vector<8x128xf32>
    %c0_4 = arith.constant 0 : index
    %c0_5 = arith.constant 0 : index
    %6 = vector.load %arg2[%c0_4, %c0_5] : memref<8x1xi32, #tpu.memory_space<vmem>>, vector<8x1xi32>
    %c0_6 = arith.constant 0 : index
    %c0_7 = arith.constant 0 : index
    %7 = vector.load %arg3[%c0_6, %c0_7] : memref<1x128xi32, #tpu.memory_space<vmem>>, vector<1x128xi32>
    %8 = vector.broadcast %6 : vector<8x1xi32> to vector<8x128xi32>
    %9 = vector.broadcast %7 : vector<1x128xi32> to vector<8x128xi32>
    %10 = arith.cmpi eq, %8, %9 : vector<8x128xi32>
    %c8_i32 = arith.constant 8 : i32
    %11 = arith.muli %arg0, %c8_i32 : i32
    %c128_i32 = arith.constant 128 : i32
    %12 = arith.muli %arg1, %c128_i32 : i32
    %c128_i32_8 = arith.constant 128 : i32
    %13 = arith.addi %12, %c128_i32_8 : i32
    %14 = arith.cmpi slt, %11, %13 : i32
    %c8_i32_9 = arith.constant 8 : i32
    %15 = arith.addi %11, %c8_i32_9 : i32
    %16 = arith.cmpi slt, %12, %15 : i32
    %17 = arith.andi %14, %16 : i1
    %18 = arith.extui %17 : i1 to i32
    %c0_i32_10 = arith.constant 0 : i32
    %19 = arith.cmpi ne, %18, %c0_i32_10 : i32
    scf.if %19 {
      %26 = tpu.iota {dimensions = array<i32: 0>} : vector<8x1xi32>
      %27 = vector.broadcast %11 : i32 to vector<8x1xi32>
      %28 = arith.addi %27, %26 : vector<8x1xi32>
      %29 = tpu.iota {dimensions = array<i32: 1>} : vector<1x128xi32>
      %30 = vector.broadcast %12 : i32 to vector<1x128xi32>
      %31 = arith.addi %30, %29 : vector<1x128xi32>
      %32 = vector.broadcast %28 : vector<8x1xi32> to vector<8x128xi32>
      %33 = vector.broadcast %31 : vector<1x128xi32> to vector<8x128xi32>
      %34 = arith.cmpi ne, %32, %33 : vector<8x128xi32>
      %cst_14 = arith.constant -1.000000e+30 : f32
      %35 = vector.broadcast %cst_14 : f32 to vector<8x128xf32>
      %36 = arith.select %34, %5, %35 : vector<8x128xi1>, vector<8x128xf32>
      %37 = arith.andi %10, %34 : vector<8x128xi1>
      %cst_15 = arith.constant 1.000000e+00 : f32
      %cst_16 = arith.constant 0.000000e+00 : f32
      %38 = vector.broadcast %cst_15 : f32 to vector<8x128xf32>
      %39 = vector.broadcast %cst_16 : f32 to vector<8x128xf32>
      %40 = arith.select %37, %38, %39 : vector<8x128xi1>, vector<8x128xf32>
      %c0_17 = arith.constant 0 : index
      %c0_18 = arith.constant 0 : index
      %41 = vector.load %arg7[%c0_17, %c0_18] : memref<8x128xf32, #tpu.memory_space<vmem>>, vector<8x128xf32>
      %c0_19 = arith.constant 0 : index
      %c0_20 = arith.constant 0 : index
      %42 = vector.load %arg8[%c0_19, %c0_20] : memref<8x128xf32, #tpu.memory_space<vmem>>, vector<8x128xf32>
      %43 = arith.maximumf %41, %36 : vector<8x128xf32>
      %44 = arith.minimumf %41, %36 : vector<8x128xf32>
      %45 = arith.subf %44, %43 : vector<8x128xf32>
      %46 = math.exp %45 : vector<8x128xf32>
      %47 = arith.cmpf ogt, %36, %41 : vector<8x128xf32>
      %48 = arith.mulf %42, %46 : vector<8x128xf32>
      %cst_21 = arith.constant 1.000000e+00 : f32
      %49 = vector.broadcast %cst_21 : f32 to vector<8x128xf32>
      %50 = arith.addf %48, %49 : vector<8x128xf32>
      %51 = arith.addf %42, %46 : vector<8x128xf32>
      %52 = arith.select %47, %50, %51 : vector<8x128xi1>, vector<8x128xf32>
      %c0_22 = arith.constant 0 : index
      %c0_23 = arith.constant 0 : index
      %53 = vector.load %arg8[%c0_22, %c0_23] : memref<8x128xf32, #tpu.memory_space<vmem>>, vector<8x128xf32>
      tpu.vector_store %arg8[%c0_22, %c0_23], %52 {strides = array<i32>} : memref<8x128xf32, #tpu.memory_space<vmem>>, vector<8x128xf32>,
      %c0_24 = arith.constant 0 : index
      %c0_25 = arith.constant 0 : index
      %54 = vector.load %arg7[%c0_24, %c0_25] : memref<8x128xf32, #tpu.memory_space<vmem>>, vector<8x128xf32>
      tpu.vector_store %arg7[%c0_24, %c0_25], %43 {strides = array<i32>} : memref<8x128xf32, #tpu.memory_space<vmem>>, vector<8x128xf32>,
      %c0_26 = arith.constant 0 : index
      %c0_27 = arith.constant 0 : index
      %55 = vector.load %arg9[%c0_26, %c0_27] : memref<8x128xf32, #tpu.memory_space<vmem>>, vector<8x128xf32>
      %56 = arith.mulf %40, %36 : vector<8x128xf32>
      %57 = arith.addf %55, %56 : vector<8x128xf32>
      %c0_28 = arith.constant 0 : index
      %c0_29 = arith.constant 0 : index
      %58 = vector.load %arg9[%c0_28, %c0_29] : memref<8x128xf32, #tpu.memory_space<vmem>>, vector<8x128xf32>
      tpu.vector_store %arg9[%c0_28, %c0_29], %57 {strides = array<i32>} : memref<8x128xf32, #tpu.memory_space<vmem>>, vector<8x128xf32>,
      %c0_30 = arith.constant 0 : index
      %c0_31 = arith.constant 0 : index
      %59 = vector.load %arg10[%c0_30, %c0_31] : memref<8x128xf32, #tpu.memory_space<vmem>>, vector<8x128xf32>
      %60 = arith.addf %59, %40 : vector<8x128xf32>
      %c0_32 = arith.constant 0 : index
      %c0_33 = arith.constant 0 : index
      %61 = vector.load %arg10[%c0_32, %c0_33] : memref<8x128xf32, #tpu.memory_space<vmem>>, vector<8x128xf32>
      tpu.vector_store %arg10[%c0_32, %c0_33], %60 {strides = array<i32>} : memref<8x128xf32, #tpu.memory_space<vmem>>, vector<8x128xf32>,
    } else {
    }
    %true = arith.constant true
    %20 = arith.xori %17, %true : i1
    %21 = arith.extui %20 : i1 to i32
    %c0_i32_11 = arith.constant 0 : i32
    %22 = arith.cmpi ne, %21, %c0_i32_11 : i32
    scf.if %22 {
      %cst_14 = arith.constant 1.000000e+00 : f32
      %cst_15 = arith.constant 0.000000e+00 : f32
      %26 = vector.broadcast %cst_14 : f32 to vector<8x128xf32>
      %27 = vector.broadcast %cst_15 : f32 to vector<8x128xf32>
      %28 = arith.select %10, %26, %27 : vector<8x128xi1>, vector<8x128xf32>
      %c0_16 = arith.constant 0 : index
      %c0_17 = arith.constant 0 : index
      %29 = vector.load %arg7[%c0_16, %c0_17] : memref<8x128xf32, #tpu.memory_space<vmem>>, vector<8x128xf32>
      %c0_18 = arith.constant 0 : index
      %c0_19 = arith.constant 0 : index
      %30 = vector.load %arg8[%c0_18, %c0_19] : memref<8x128xf32, #tpu.memory_space<vmem>>, vector<8x128xf32>
      %31 = arith.maximumf %29, %5 : vector<8x128xf32>
      %32 = arith.minimumf %29, %5 : vector<8x128xf32>
      %33 = arith.subf %32, %31 : vector<8x128xf32>
      %34 = math.exp %33 : vector<8x128xf32>
      %35 = arith.cmpf ogt, %5, %29 : vector<8x128xf32>
      %36 = arith.mulf %30, %34 : vector<8x128xf32>
      %cst_20 = arith.constant 1.000000e+00 : f32
      %37 = vector.broadcast %cst_20 : f32 to vector<8x128xf32>
      %38 = arith.addf %36, %37 : vector<8x128xf32>
      %39 = arith.addf %30, %34 : vector<8x128xf32>
      %40 = arith.select %35, %38, %39 : vector<8x128xi1>, vector<8x128xf32>
      %c0_21 = arith.constant 0 : index
      %c0_22 = arith.constant 0 : index
      %41 = vector.load %arg8[%c0_21, %c0_22] : memref<8x128xf32, #tpu.memory_space<vmem>>, vector<8x128xf32>
      tpu.vector_store %arg8[%c0_21, %c0_22], %40 {strides = array<i32>} : memref<8x128xf32, #tpu.memory_space<vmem>>, vector<8x128xf32>,
      %c0_23 = arith.constant 0 : index
      %c0_24 = arith.constant 0 : index
      %42 = vector.load %arg7[%c0_23, %c0_24] : memref<8x128xf32, #tpu.memory_space<vmem>>, vector<8x128xf32>
      tpu.vector_store %arg7[%c0_23, %c0_24], %31 {strides = array<i32>} : memref<8x128xf32, #tpu.memory_space<vmem>>, vector<8x128xf32>,
      %c0_25 = arith.constant 0 : index
      %c0_26 = arith.constant 0 : index
      %43 = vector.load %arg9[%c0_25, %c0_26] : memref<8x128xf32, #tpu.memory_space<vmem>>, vector<8x128xf32>
      %44 = arith.mulf %28, %5 : vector<8x128xf32>
      %45 = arith.addf %43, %44 : vector<8x128xf32>
      %c0_27 = arith.constant 0 : index
      %c0_28 = arith.constant 0 : index
      %46 = vector.load %arg9[%c0_27, %c0_28] : memref<8x128xf32, #tpu.memory_space<vmem>>, vector<8x128xf32>
      tpu.vector_store %arg9[%c0_27, %c0_28], %45 {strides = array<i32>} : memref<8x128xf32, #tpu.memory_space<vmem>>, vector<8x128xf32>,
      %c0_29 = arith.constant 0 : index
      %c0_30 = arith.constant 0 : index
      %47 = vector.load %arg10[%c0_29, %c0_30] : memref<8x128xf32, #tpu.memory_space<vmem>>, vector<8x128xf32>
      %48 = arith.addf %47, %28 : vector<8x128xf32>
      %c0_31 = arith.constant 0 : index
      %c0_32 = arith.constant 0 : index
      %49 = vector.load %arg10[%c0_31, %c0_32] : memref<8x128xf32, #tpu.memory_space<vmem>>, vector<8x128xf32>
      tpu.vector_store %arg10[%c0_31, %c0_32], %48 {strides = array<i32>} : memref<8x128xf32, #tpu.memory_space<vmem>>, vector<8x128xf32>,
    } else {
    }
    %c0_i32_12 = arith.constant 0 : i32
    %23 = arith.cmpi eq, %arg1, %c0_i32_12 : i32
    %24 = arith.extui %23 : i1 to i32
    %c0_i32_13 = arith.constant 0 : i32
    %25 = arith.cmpi ne, %24, %c0_i32_13 : i32
    scf.if %25 {
      %c0_14 = arith.constant 0 : index
      %c0_15 = arith.constant 0 : index
      %26 = vector.load %arg7[%c0_14, %c0_15] : memref<8x128xf32, #tpu.memory_space<vmem>>, vector<8x128xf32>
      %cst_16 = arith.constant dense<0xFF800000> : vector<8xf32>
      %27 = vector.multi_reduction <maximumf>, %26, %cst_16 [1] : vector<8x128xf32> to vector<8xf32>
      %28 = vector.shape_cast %27 : vector<8xf32> to vector<8x1xf32>
      %c0_17 = arith.constant 0 : index
      %c0_18 = arith.constant 0 : index
      %29 = vector.load %arg8[%c0_17, %c0_18] : memref<8x128xf32, #tpu.memory_space<vmem>>, vector<8x128xf32>
      %30 = vector.broadcast %28 : vector<8x1xf32> to vector<8x128xf32>
      %31 = arith.subf %26, %30 : vector<8x128xf32>
      %32 = math.exp %31 : vector<8x128xf32>
      %33 = arith.mulf %29, %32 : vector<8x128xf32>
      %cst_19 = arith.constant dense<0.000000e+00> : vector<8xf32>
      %34 = vector.multi_reduction <add>, %33, %cst_19 [1] : vector<8x128xf32> to vector<8xf32>
      %35 = vector.shape_cast %34 : vector<8xf32> to vector<8x1xf32>
      %c0_20 = arith.constant 0 : index
      %c0_21 = arith.constant 0 : index
      %36 = vector.load %arg9[%c0_20, %c0_21] : memref<8x128xf32, #tpu.memory_space<vmem>>, vector<8x128xf32>
      %cst_22 = arith.constant dense<0.000000e+00> : vector<8xf32>
      %37 = vector.multi_reduction <add>, %36, %cst_22 [1] : vector<8x128xf32> to vector<8xf32>
      %38 = vector.shape_cast %37 : vector<8xf32> to vector<8x1xf32>
      %c0_23 = arith.constant 0 : index
      %c0_24 = arith.constant 0 : index
      %39 = vector.load %arg10[%c0_23, %c0_24] : memref<8x128xf32, #tpu.memory_space<vmem>>, vector<8x128xf32>
      %cst_25 = arith.constant dense<0.000000e+00> : vector<8xf32>
      %40 = vector.multi_reduction <add>, %39, %cst_25 [1] : vector<8x128xf32> to vector<8xf32>
      %41 = vector.shape_cast %40 : vector<8xf32> to vector<8x1xf32>
      %42 = math.log %35 : vector<8x1xf32>
      %43 = arith.addf %42, %28 : vector<8x1xf32>
      %cst_26 = arith.constant 1.000000e+00 : f32
      %44 = vector.broadcast %cst_26 : f32 to vector<8x1xf32>
      %45 = arith.maximumf %41, %44 : vector<8x1xf32>
      %46 = arith.divf %38, %45 : vector<8x1xf32>
      %47 = arith.subf %46, %43 : vector<8x1xf32>
      %cst_27 = arith.constant -1.000000e+00 : f32
      %48 = vector.broadcast %cst_27 : f32 to vector<8x1xf32>
      %49 = arith.mulf %48, %47 : vector<8x1xf32>
      %50 = tpu.iota {dimensions = array<i32: 0>} : vector<8x1xi32>
      %51 = vector.broadcast %11 : i32 to vector<8x1xi32>
      %52 = arith.addi %51, %50 : vector<8x1xi32>
      %c16_i32 = arith.constant 16 : i32
      %53 = vector.broadcast %c16_i32 : i32 to vector<8x1xi32>
      %54 = arith.cmpi slt, %52, %53 : vector<8x1xi32>
      %cst_28 = arith.constant 0.000000e+00 : f32
      %55 = vector.broadcast %cst_28 : f32 to vector<8x1xf32>
      %56 = arith.cmpf ogt, %41, %55 : vector<8x1xf32>
      %57 = arith.andi %54, %56 : vector<8x1xi1>
      %cst_29 = arith.constant 0.000000e+00 : f32
      %58 = vector.broadcast %cst_29 : f32 to vector<8x1xf32>
      %59 = arith.select %57, %49, %58 : vector<8x1xi1>, vector<8x1xf32>
      %c0_30 = arith.constant 0 : index
      %c0_31 = arith.constant 0 : index
      %60 = vector.load %arg6[%c0_30, %c0_31] : memref<8x1xf32, #tpu.memory_space<vmem>>, vector<8x1xf32>
      tpu.vector_store %arg6[%c0_30, %c0_31], %59 {strides = array<i32>} : memref<8x1xf32, #tpu.memory_space<vmem>>, vector<8x1xf32>,
    } else {
    }
    return
  }
  func.func @transform_0(%arg0: i32, %arg1: i32) -> (i32, i32) {
    %c0_i32 = arith.constant 0 : i32
    %c0_i32_0 = arith.constant 0 : i32
    return %arg0, %c0_i32 : i32, i32
  }
  func.func @transform_1(%arg0: i32, %arg1: i32) -> (i32, i32) {
    %c0_i32 = arith.constant 0 : i32
    %c0_i32_0 = arith.constant 0 : i32
    return %c0_i32, %arg1 : i32, i32
  }
  func.func @transform_2(%arg0: i32, %arg1: i32) -> (i32, i32) {
    %c0_i32 = arith.constant 0 : i32
    %c0_i32_0 = arith.constant 0 : i32
    return %arg0, %c0_i32 : i32, i32
  }
  func.func @transform_3(%arg0: i32, %arg1: i32) -> (i32, i32) {
    %c0_i32 = arith.constant 0 : i32
    %c0_i32_0 = arith.constant 0 : i32
    return %arg1, %c0_i32 : i32, i32
  }
  func.func @transform_4(%arg0: i32, %arg1: i32) -> (i32, i32) {
    %c0_i32 = arith.constant 0 : i32
    %c0_i32_0 = arith.constant 0 : i32
    return %arg0, %c0_i32 : i32, i32
  }
}

</mosaic_0001>

<llo_original>
// kernel: tpu_custom_call.1
$region0: #{tpu_custom_call.1}
  #allocation0 [shape = 'u32[]', space=smem, size = 0x4, offset = 0x4, fixed_abs, tag = 'smem constant byte address 0x4 - core index']
  #allocation1 [shape = 'u32[144,128]{1,0:T(1,128)}', space=vmem, size = 0x12000, scoped, tag = 'internal scratch']
  #allocation2 [shape = 'f32[8,128]{1,0:T(8,128)}', space=vmem, size = 0x1000, scoped, tag = 'scratch operand']
  #allocation3 [shape = 'f32[8,128]{1,0:T(8,128)}', space=vmem, size = 0x1000, scoped, tag = 'scratch operand']
  #allocation4 [shape = 'f32[8,128]{1,0:T(8,128)}', space=vmem, size = 0x1000, scoped, tag = 'scratch operand']
  #allocation5 [shape = 'f32[8,128]{1,0:T(8,128)}', space=vmem, size = 0x1000, scoped, tag = 'scratch operand']
  %s0 = inlined_call_operand.vmem [shape: s32[16,1], index: 0, kind: input, shape index: {}]
  %s1 = inlined_call_operand.vmem [shape: s32[1,128], index: 1, kind: input, shape index: {}]
  %s2 = inlined_call_operand.vmem [shape: f32[16,128], index: 2, kind: input, shape index: {}]
  %s3 = inlined_call_operand.hbm [shape: f32[128,128], index: 3, kind: input, shape index: {}]
  %s4 = inlined_call_operand.vmem [shape: f32[16,1], index: 4, kind: output, shape index: {}]
  %s5 = sld [smem:[#allocation0]]
  $region69: #{tpu_custom_call.1} parent=0
    _
  %s7 = ssub.s32 1, %s5
  %s8 = scalar_select 0, %s7, %s5
  $region1: #{tpu_custom_call.1} parent=0
    #allocation6 [shape = 'u8[65536]{0}', space=vmem, size = 0x10000, scoped, tag = 'input window, operand 3, single buffered']
    #allocation7 [shape = 's32[2]{0}', space=sflag, size = 0x8, scoped, tag = 'scoped memory for tpu_custom_call.1']
    %9 = vsyncpa [#allocation7], 0
    loop: start=0, step=1, limit=4
    $region2: #{tpu_custom_call.1} parent=1 // loop_pre_header
      _
    $region3: #{tpu_custom_call.1} parent=1 // loop_header
      %s11 = sphi 0, %s15
      %p12 = scmp.ge.s32.totalorder %s11, 4
      %s18 = sphi 0, %s30
      %s19 = sphi 0, %s26
      %s20 = sphi 0, %s18
      %s21 = sphi 0, %s19
      %s22 = sphi 0, %s20
      %s23 = sphi 0, %s21
      %s33 = sphi 0, %s35
      %s36 = sphi 0, %s33
      %s37 = sphi 0, %s36
      %s53 = sphi 0, %s37
      %s59 = sphi 0, %s61
      %s62 = sphi 0, %s59
      %s63 = sphi 0, %s62
      %s79 = sphi 0, %s63
      %s85 = sphi 0, %s87
      %s88 = sphi 0, %s85
      %s89 = sphi 0, %s88
      %s105 = sphi 0, %s89
      %s111 = sphi 0, %s113
      %s114 = sphi 0, %s111
      %s115 = sphi 0, %s114
      %s131 = sphi 0, %s115
      %s137 = sphi 0, %s139
      %s140 = sphi 0, %s137
      %s141 = sphi 0, %s140
      %s157 = sphi 0, %s141
    $region4: #{tpu_custom_call.1} parent=1 // loop_header_branch
      %14 = sbr.rel (%p12) target = $region8
    $region5: #{tpu_custom_call.1} parent=1 // loop_body
      %s16 = ssub.s32 %s11, 1
      %s17 = ssub.s32 %s11, 2
      %s24 = sadd.s32 1, %s19
      %p25 = scmp.ge.s32.totalorder %s24, 1
      %s26 = scalar_select %p25, 0, %s24
      %s27 = sadd.s32 1, %s18
      %s28 = scalar_select %p25, %s27, %s18
      %p29 = scmp.ge.s32.totalorder %s28, 2
      %s30 = scalar_select %p29, 0, %s28
      %s31 = ssub.s32 %s18, %s30
      %p32 = scmp.eq.s32.totalorder %s31, 0
      %s34 = sadd.s32 %s33, 1
      %s35 = scalar_select %p32, %s33, %s34
      %p38 = pneg %p32
      %p39 = scmp.eq.s32.totalorder %s11, 1
      %p40 = por %p38, %p39
      %p41 = scmp.ne.s32.totalorder %s33, %s36
      %p42 = scmp.eq.s32.totalorder %s11, 0
      %p43 = por %p41, %p42
      %p44 = scmp.ne.s32.totalorder %s33, %s36
      %p45 = scmp.eq.s32.totalorder %s16, 1
      %p46 = por %p44, %p45
      %p47 = scmp.ne.s32.totalorder %s36, %s37
      %p48 = scmp.eq.s32.totalorder %s16, 0
      %p49 = por %p47, %p48
      %p50 = scmp.ne.s32.totalorder %s36, %s37
      %p51 = scmp.eq.s32.totalorder %s17, 1
      %p52 = por %p50, %p51
      %p54 = scmp.ne.s32.totalorder %s37, %s53
      %p55 = scmp.eq.s32.totalorder %s17, 0
      %p56 = por %p54, %p55
      %s57 = ssub.s32 %s19, %s26
      %p58 = scmp.eq.s32.totalorder %s57, 0
      %s60 = sadd.s32 %s59, 1
      %s61 = scalar_select %p58, %s59, %s60
      %p64 = pneg %p58
      %p65 = scmp.eq.s32.totalorder %s11, 1
      %p66 = por %p64, %p65
      %p67 = scmp.ne.s32.totalorder %s59, %s62
      %p68 = scmp.eq.s32.totalorder %s11, 0
      %p69 = por %p67, %p68
      %p70 = scmp.ne.s32.totalorder %s59, %s62
      %p71 = scmp.eq.s32.totalorder %s16, 1
      %p72 = por %p70, %p71
      %p73 = scmp.ne.s32.totalorder %s62, %s63
      %p74 = scmp.eq.s32.totalorder %s16, 0
      %p75 = por %p73, %p74
      %p76 = scmp.ne.s32.totalorder %s62, %s63
      %p77 = scmp.eq.s32.totalorder %s17, 1
      %p78 = por %p76, %p77
      %p80 = scmp.ne.s32.totalorder %s63, %s79
      %p81 = scmp.eq.s32.totalorder %s17, 0
      %p82 = por %p80, %p81
      %s83 = ssub.s32 %s18, %s30
      %p84 = scmp.eq.s32.totalorder %s83, 0
      %s86 = sadd.s32 %s85, 1
      %s87 = scalar_select %p84, %s85, %s86
      %p90 = pneg %p84
      %p91 = scmp.eq.s32.totalorder %s11, 1
      %p92 = por %p90, %p91
      %p93 = scmp.ne.s32.totalorder %s85, %s88
      %p94 = scmp.eq.s32.totalorder %s11, 0
      %p95 = por %p93, %p94
      %p96 = scmp.ne.s32.totalorder %s85, %s88
      %p97 = scmp.eq.s32.totalorder %s16, 1
      %p98 = por %p96, %p97
      %p99 = scmp.ne.s32.totalorder %s88, %s89
      %p100 = scmp.eq.s32.totalorder %s16, 0
      %p101 = por %p99, %p100
      %p102 = scmp.ne.s32.totalorder %s88, %s89
      %p103 = scmp.eq.s32.totalorder %s17, 1
      %p104 = por %p102, %p103
      %p106 = scmp.ne.s32.totalorder %s89, %s105
      %p107 = scmp.eq.s32.totalorder %s17, 0
      %p108 = por %p106, %p107
      %s109 = ssub.s32 %s19, %s26
      %p110 = scmp.eq.s32.totalorder %s109, 0
      %s112 = sadd.s32 %s111, 1
      %s113 = scalar_select %p110, %s111, %s112
      %p116 = pneg %p110
      %p117 = scmp.eq.s32.totalorder %s11, 1
      %p118 = por %p116, %p117
      %p119 = scmp.ne.s32.totalorder %s111, %s114
      %p120 = scmp.eq.s32.totalorder %s11, 0
      %p121 = por %p119, %p120
      %p122 = scmp.ne.s32.totalorder %s111, %s114
      %p123 = scmp.eq.s32.totalorder %s16, 1
      %p124 = por %p122, %p123
      %p125 = scmp.ne.s32.totalorder %s114, %s115
      %p126 = scmp.eq.s32.totalorder %s16, 0
      %p127 = por %p125, %p126
      %p128 = scmp.ne.s32.totalorder %s114, %s115
      %p129 = scmp.eq.s32.totalorder %s17, 1
      %p130 = por %p128, %p129
      %p132 = scmp.ne.s32.totalorder %s115, %s131
      %p133 = scmp.eq.s32.totalorder %s17, 0
      %p134 = por %p132, %p133
      %s135 = ssub.s32 %s18, %s30
      %p136 = scmp.eq.s32.totalorder %s135, 0
      %s138 = sadd.s32 %s137, 1
      %s139 = scalar_select %p136, %s137, %s138
      %p142 = pneg %p136
      %p143 = scmp.eq.s32.totalorder %s11, 1
      %p144 = por %p142, %p143
      %p145 = scmp.ne.s32.totalorder %s137, %s140
      %p146 = scmp.eq.s32.totalorder %s11, 0
      %p147 = por %p145, %p146
      %p148 = scmp.ne.s32.totalorder %s137, %s140
      %p149 = scmp.eq.s32.totalorder %s16, 1
      %p150 = por %p148, %p149
      %p151 = scmp.ne.s32.totalorder %s140, %s141
      %p152 = scmp.eq.s32.totalorder %s16, 0
      %p153 = por %p151, %p152
      %p154 = scmp.ne.s32.totalorder %s140, %s141
      %p155 = scmp.eq.s32.totalorder %s17, 1
      %p156 = por %p154, %p155
      %p158 = scmp.ne.s32.totalorder %s141, %s157
      %p159 = scmp.eq.s32.totalorder %s17, 0
      %p160 = por %p158, %p159
      %p161 = scmp.le.s32.totalorder 1, %s11
      %p162 = scmp.lt.s32.totalorder %s11, 3
      %p163 = pnand %p161, %p162
      %p164 = pneg %p163
      // Predicated region
      $region9: #{tpu_custom_call.1} parent=5 // pred_check
        _
      $region10: #{tpu_custom_call.1} parent=5 // pred_check_branch
        %166 = sbr.rel (%p163) target = $region12
      $region11: #{tpu_custom_call.1} parent=5 // pred_region
        %s167 = ssub.s32 %s11, 1
        // Predicated region
        $region13: #{tpu_custom_call.1} parent=11 // pred_check
          %p168 = pneg %p75
        $region14: #{tpu_custom_call.1} parent=11 // pred_check_branch
          %170 = sbr.rel (%p168) target = $region16
        $region15: #{tpu_custom_call.1} parent=11 // pred_region
          %p171 = scmp.lt.s32.totalorder %s21, 0
          %s172 = scalar_select %p171, %s21, 0
          %s173 = scalar_lea.vmem %s1, %s172
        $region16: #{tpu_custom_call.1} parent=11 // pred_fallthru
          _
        // Predicated region
        $region17: #{tpu_custom_call.1} parent=11 // pred_check
          %p174 = pneg %p127
        $region18: #{tpu_custom_call.1} parent=11 // pred_check_branch
          %176 = sbr.rel (%p174) target = $region20
        $region19: #{tpu_custom_call.1} parent=11 // pred_region
          %s177 = smul.u32 16, %s21
          %s179 = ssub.s32 2048, 2048
          %180 = vsyncadd [#allocation7], %s179
          %s181 = smul.addr %s177, 128
          %s182 = scalar_lea.hbm %s3, %s181
          %s183 = sshll.u32 [#allocation6], 4
          %s184 = int_to_ptr.vmem [resolvable:$true] %s183
          %189 = dma.hbm_to_vmem [thread:$0]  %s182, 2048, %s184, [#allocation7], 128, 128, 8
        $region20: #{tpu_custom_call.1} parent=11 // pred_fallthru
          _
      $region12: #{tpu_custom_call.1} parent=5 // pred_fallthru
        _
      %p190 = scmp.lt.s32.totalorder %s11, 2
      // Predicated region
      $region21: #{tpu_custom_call.1} parent=5 // pred_check
        %p191 = pneg %p190
      $region22: #{tpu_custom_call.1} parent=5 // pred_check_branch
        %193 = sbr.rel (%p191) target = $region24
      $region23: #{tpu_custom_call.1} parent=5 // pred_region
        // Predicated region
        $region25: #{tpu_custom_call.1} parent=23 // pred_check
          %p194 = pneg %p43
        $region26: #{tpu_custom_call.1} parent=23 // pred_check_branch
          %196 = sbr.rel (%p194) target = $region28
        $region27: #{tpu_custom_call.1} parent=23 // pred_region
          %p197 = scmp.lt.s32.totalorder %s18, 1
          %s198 = scalar_select %p197, %s18, 1
          %s199 = smul.addr %s198, 8
          %s200 = scalar_lea.vmem %s0, %s199
        $region28: #{tpu_custom_call.1} parent=23 // pred_fallthru
          _
        // Predicated region
        $region29: #{tpu_custom_call.1} parent=23 // pred_check
          %p201 = pneg %p95
        $region30: #{tpu_custom_call.1} parent=23 // pred_check_branch
          %203 = sbr.rel (%p201) target = $region32
        $region31: #{tpu_custom_call.1} parent=23 // pred_region
          %p204 = scmp.lt.s32.totalorder %s18, 1
          %s205 = scalar_select %p204, %s18, 1
          %s206 = smul.addr %s205, 8
          %s207 = scalar_lea.vmem %s2, %s206
        $region32: #{tpu_custom_call.1} parent=23 // pred_fallthru
          _
      $region24: #{tpu_custom_call.1} parent=5 // pred_fallthru
        _
      %p208 = scmp.le.s32.totalorder 1, %s11
      %p209 = scmp.lt.s32.totalorder %s11, 3
      %p210 = pnand %p208, %p209
      %p211 = pneg %p210
      // Predicated region
      $region33: #{tpu_custom_call.1} parent=5 // pred_check
        _
      $region34: #{tpu_custom_call.1} parent=5 // pred_check_branch
        %213 = sbr.rel (%p210) target = $region36
      $region35: #{tpu_custom_call.1} parent=5 // pred_region
        %s214 = ssub.s32 %s11, 1
        // Predicated region
        $region37: #{tpu_custom_call.1} parent=35 // pred_check
          %p215 = pneg %p127
        $region38: #{tpu_custom_call.1} parent=35 // pred_check_branch
          %217 = sbr.rel (%p215) target = $region40
        $region39: #{tpu_custom_call.1} parent=35 // pred_region
          %218 = dma.done [#allocation7], 2048
        $region40: #{tpu_custom_call.1} parent=35 // pred_fallthru
          _
        %p219 = scmp.lt.s32.totalorder %s20, 1
        %s220 = scalar_select %p219, %s20, 1
        %s221 = smul.addr %s220, 8
        %s222 = scalar_lea.vmem %s0, %s221
        %p223 = pneg %p49
        %p224 = pneg %p46
        %p225 = scmp.lt.s32.totalorder %s21, 0
        %s226 = scalar_select %p225, %s21, 0
        %s227 = scalar_lea.vmem %s1, %s226
        %p228 = pneg %p75
        %p229 = pneg %p72
        %p230 = scmp.lt.s32.totalorder %s20, 1
        %s231 = scalar_select %p230, %s20, 1
        %s232 = smul.addr %s231, 8
        %s233 = scalar_lea.vmem %s2, %s232
        %p234 = pneg %p101
        %p235 = pneg %p98
        %p236 = pneg %p127
        %p237 = pneg %p124
        %p238 = pneg %p153
        %p239 = pneg %p150
        %p240 = scmp.lt.s32.totalorder %s20, 1
        %s241 = scalar_select %p240, %s20, 1
        %s242 = smul.addr %s241, 8
        %s243 = scalar_lea.vmem %s4, %s242
        %p244 = scmp.lt.s32.totalorder %s20, 1
        %s245 = scalar_select %p244, %s20, 1
        %s246 = smul.addr %s245, 8
        %s247 = scalar_lea.vmem %s0, %s246
        %p248 = scmp.lt.s32.totalorder %s21, 0
        %s249 = scalar_select %p248, %s21, 0
        %s250 = scalar_lea.vmem %s1, %s249
        %p251 = scmp.lt.s32.totalorder %s20, 1
        %s252 = scalar_select %p251, %s20, 1
        %s253 = smul.addr %s252, 8
        %s254 = scalar_lea.vmem %s2, %s253
        %s255 = smul.u32 16, %s21
        %p256 = scmp.lt.s32.totalorder %s20, 1
        %s257 = scalar_select %p256, %s20, 1
        %s258 = smul.addr %s257, 8
        %s259 = scalar_lea.vmem %s4, %s258
        %p260 = scmp.eq.s32.totalorder %s21, 0
        // Predicated region
        $region41: #{tpu_custom_call.1} parent=35 // pred_check
          %p261 = pneg %p260
        $region42: #{tpu_custom_call.1} parent=35 // pred_check_branch
          %263 = sbr.rel (%p261) target = $region44
        $region43: #{tpu_custom_call.1} parent=35 // pred_region
          %264 = vst [vmem:[#allocation2] sm:$0xff] -1e+30
          %265 = vst [vmem:[#allocation3] sm:$0xff] 0.0
          %266 = vst [vmem:[#allocation4] sm:$0xff] 0.0
          %267 = vst [vmem:[#allocation5] sm:$0xff] 0.0
        $region44: #{tpu_custom_call.1} parent=35 // pred_fallthru
          _
        %v268 = vld [vmem:[%s254] sm:$0xff]
        %v269 = vld [vmem:[#allocation6] sm:$0xff]
        %v270 = vld [vmem:[#allocation6 + $0x8] sm:$0xff]
        %v271 = vld [vmem:[#allocation6 + $0x10] sm:$0xff]
        %v272 = vld [vmem:[#allocation6 + $0x18] sm:$0xff]
        %v273 = vld [vmem:[#allocation6 + $0x20] sm:$0xff]
        %v274 = vld [vmem:[#allocation6 + $0x28] sm:$0xff]
        %v275 = vld [vmem:[#allocation6 + $0x30] sm:$0xff]
        %v276 = vld [vmem:[#allocation6 + $0x38] sm:$0xff]
        %v277 = vld [vmem:[#allocation6 + $0x40] sm:$0xff]
        %v278 = vld [vmem:[#allocation6 + $0x48] sm:$0xff]
        %v279 = vld [vmem:[#allocation6 + $0x50] sm:$0xff]
        %v280 = vld [vmem:[#allocation6 + $0x58] sm:$0xff]
        %v281 = vld [vmem:[#allocation6 + $0x60] sm:$0xff]
        %v282 = vld [vmem:[#allocation6 + $0x68] sm:$0xff]
        %v283 = vld [vmem:[#allocation6 + $0x70] sm:$0xff]
        %v284 = vld [vmem:[#allocation6 + $0x78] sm:$0xff]
        %285 = vmatprep.subr.mxu0 0.0
        %286 = vmatpush1.xpose.msra.mxu0 %v269
        %287 = vmatprep.subr.mxu0 0.0
        %288 = vmatpush1.xpose.msra.mxu0 %v270
        %289 = vmatprep.subr.mxu0 0.0
        %290 = vmatpush1.xpose.msra.mxu0 %v271
        %291 = vmatprep.subr.mxu0 0.0
        %292 = vmatpush1.xpose.msra.mxu0 %v272
        %293 = vmatprep.subr.mxu0 0.0
        %294 = vmatpush1.xpose.msra.mxu0 %v273
        %295 = vmatprep.subr.mxu0 0.0
        %296 = vmatpush1.xpose.msra.mxu0 %v274
        %297 = vmatprep.subr.mxu0 0.0
        %298 = vmatpush1.xpose.msra.mxu0 %v275
        %299 = vmatprep.subr.mxu0 0.0
        %300 = vmatpush1.xpose.msra.mxu0 %v276
        %301 = vmatprep.subr.mxu0 0.0
        %302 = vmatpush1.xpose.msra.mxu0 %v277
        %303 = vmatprep.subr.mxu0 0.0
        %304 = vmatpush1.xpose.msra.mxu0 %v278
        %305 = vmatprep.subr.mxu0 0.0
        %306 = vmatpush1.xpose.msra.mxu0 %v279
        %307 = vmatprep.subr.mxu0 0.0
        %308 = vmatpush1.xpose.msra.mxu0 %v280
        %309 = vmatprep.subr.mxu0 0.0
        %310 = vmatpush1.xpose.msra.mxu0 %v281
        %311 = vmatprep.subr.mxu0 0.0
        %312 = vmatpush1.xpose.msra.mxu0 %v282
        %313 = vmatprep.subr.mxu0 0.0
        %314 = vmatpush1.xpose.msra.mxu0 %v283
        %315 = vmatprep.subr.mxu0 0.0
        %316 = vmatpush1.xpose.msra.mxu0 %v284
        %317 = vmatprep.subr.mxu0 0.0
        %318 = vmatpush1.xpose.msra.mxu0 0.0
        %319 = vmatprep.subr.mxu0 0.0
        %320 = vmatpush1.xpose.msra.mxu0 0.0
        %321 = vmatprep.subr.mxu0 0.0
        %322 = vmatpush1.xpose.msra.mxu0 0.0
        %323 = vmatprep.subr.mxu0 0.0
        %324 = vmatpush1.xpose.msra.mxu0 0.0
        %325 = vmatprep.subr.mxu0 0.0
        %326 = vmatpush1.xpose.msra.mxu0 0.0
        %327 = vmatprep.subr.mxu0 0.0
        %328 = vmatpush1.xpose.msra.mxu0 0.0
        %329 = vmatprep.subr.mxu0 0.0
        %330 = vmatpush1.xpose.msra.mxu0 0.0
        %331 = vmatprep.subr.mxu0 0.0
        %332 = vmatpush1.xpose.msra.mxu0 0.0
        %333 = vmatprep.subr.mxu0 0.0
        %334 = vmatpush1.xpose.msra.mxu0 0.0
        %335 = vmatprep.subr.mxu0 0.0
        %336 = vmatpush1.xpose.msra.mxu0 0.0
        %337 = vmatprep.subr.mxu0 0.0
        %338 = vmatpush1.xpose.msra.mxu0 0.0
        %339 = vmatprep.subr.mxu0 0.0
        %340 = vmatpush1.xpose.msra.mxu0 0.0
        %341 = vmatprep.subr.mxu0 0.0
        %342 = vmatpush1.xpose.msra.mxu0 0.0
        %343 = vmatprep.subr.mxu0 0.0
        %344 = vmatpush1.xpose.msra.mxu0 0.0
        %345 = vmatprep.subr.mxu0 0.0
        %346 = vmatpush1.xpose.msra.mxu0 0.0
        %347 = vmatprep.subr.mxu0 0.0
        %348 = vmatpush1.xpose.msra.mxu0 0.0
        %349 = vmatprep.mubr.f32.mxu0 0.0
        %350 = vmatmul.mubr.f32.gmra.mrb[0].mxu0 %v268
        %v351 = vpop.f32.mrb[0].mxu0
        %v352 = vadd.f32 0.0, %v351
        %v353 = vpop.f32.mrb[0].mxu0
        %354 = vdwg.mxu0
        %v355 = vld [vmem:[%s247] sm:$0xff]
        %v356 = vld [vmem:[%s250] sm:$0x1]
        %357 = vset.pattern.permute.xlu0 0
        %358 = vperm.xlu0 %357, %v355
        %v359 = vpop.permute.xlu0 %358
        %v360 = vlaneseq
        %v361 = vshrl.u32 %v360, 7
        %v362 = vsub.s32 0, %v361
        %v363 = vrot.slane %v356, %v362
        %vm364 = vcmp.eq.s32.totalorder %v359, %v363
        %s365 = smul.u32 %s20, 8
        %s366 = smul.u32 %s21, 128
        %s367 = sadd.s32 %s366, 128
        %p368 = scmp.lt.s32.totalorder %s365, %s367
        %s369 = sadd.s32 %s365, 8
        %p370 = scmp.lt.s32.totalorder %s366, %s369
        %p371 = pnand %p368, %p370
        %p372 = pneg %p371
        // Predicated region
        $region45: #{tpu_custom_call.1} parent=35 // pred_check
          _
        $region46: #{tpu_custom_call.1} parent=35 // pred_check_branch
          %374 = sbr.rel (%p371) target = $region48
        $region47: #{tpu_custom_call.1} parent=35 // pred_region
          %v375 = vlaneseq
          %v376 = vshrl.u32 %v375, 7
          %v377 = vstv %s365
          %v378 = vadd.s32 %v377, %v376
          %v379 = vlaneseq
          %v380 = vand.u32 %v379, 127
          %v381 = vstv %s366
          %v382 = vadd.s32 %v381, %v380
          %vm383 = vcmp.ne.s32.totalorder %v378, %v382
          %v384 = vsel %vm383, %v352, -1e+30
          %vm385 = vmand %vm364, %vm383
          %v386 = vsel %vm385, 1.0, 0.0
          %v387 = vld [vmem:[#allocation2] sm:$0xff]
          %v388 = vld [vmem:[#allocation3] sm:$0xff]
          %v389 = vmax.f32 %v387, %v384
          %v390 = vmin.f32 %v387, %v384
          %v391 = vsub.f32 %v390, %v389
          %v392 = vmul.f32 %v391, 1.442695
          %v393 = vpow.pop %v392
          %vm394 = vcmp.gt.f32.partialorder %v384, %v387
          %v395 = vmul.f32 %v388, %v393
          %v396 = vadd.f32 %v395, 1.0
          %v397 = vadd.f32 %v388, %v393
          %v398 = vsel %vm394, %v396, %v397
          %399 = vst [vmem:[#allocation3] sm:$0xff] %v398
          %400 = vst [vmem:[#allocation2] sm:$0xff] %v389
          %v401 = vld [vmem:[#allocation4] sm:$0xff]
          %v402 = vmul.f32 %v386, %v384
          %v403 = vadd.f32 %v401, %v402
          %404 = vst [vmem:[#allocation4] sm:$0xff] %v403
          %v405 = vld [vmem:[#allocation5] sm:$0xff]
          %v406 = vadd.f32 %v405, %v386
          %407 = vst [vmem:[#allocation5] sm:$0xff] %v406
        $region48: #{tpu_custom_call.1} parent=35 // pred_fallthru
          _
        %p408 = pneg %p372
        // Predicated region
        $region49: #{tpu_custom_call.1} parent=35 // pred_check
          _
        $region50: #{tpu_custom_call.1} parent=35 // pred_check_branch
          %410 = sbr.rel (%p372) target = $region52
        $region51: #{tpu_custom_call.1} parent=35 // pred_region
          %v411 = vsel %vm364, 1.0, 0.0
          %v412 = vld [vmem:[#allocation2] sm:$0xff]
          %v413 = vld [vmem:[#allocation3] sm:$0xff]
          %v414 = vmax.f32 %v412, %v352
          %v415 = vmin.f32 %v412, %v352
          %v416 = vsub.f32 %v415, %v414
          %v417 = vmul.f32 %v416, 1.442695
          %v418 = vpow.pop %v417
          %vm419 = vcmp.gt.f32.partialorder %v352, %v412
          %v420 = vmul.f32 %v413, %v418
          %v421 = vadd.f32 %v420, 1.0
          %v422 = vadd.f32 %v413, %v418
          %v423 = vsel %vm419, %v421, %v422
          %424 = vst [vmem:[#allocation3] sm:$0xff] %v423
          %425 = vst [vmem:[#allocation2] sm:$0xff] %v414
          %v426 = vld [vmem:[#allocation4] sm:$0xff]
          %v427 = vmul.f32 %v411, %v352
          %v428 = vadd.f32 %v426, %v427
          %429 = vst [vmem:[#allocation4] sm:$0xff] %v428
          %v430 = vld [vmem:[#allocation5] sm:$0xff]
          %v431 = vadd.f32 %v430, %v411
          %432 = vst [vmem:[#allocation5] sm:$0xff] %v431
        $region52: #{tpu_custom_call.1} parent=35 // pred_fallthru
          _
        // Predicated region
        $region53: #{tpu_custom_call.1} parent=35 // pred_check
          %p433 = pneg %p260
        $region54: #{tpu_custom_call.1} parent=35 // pred_check_branch
          %435 = sbr.rel (%p433) target = $region56
        $region55: #{tpu_custom_call.1} parent=35 // pred_region
          %v436 = vld [vmem:[#allocation2] sm:$0xff]
          %437 = vmax.xlane.f32.xlu0 %v436
          %v438 = vpop.xlane.xlu0 %437
          %v439 = vld [vmem:[#allocation3] sm:$0xff]
          %v440 = vsub.f32 %v436, %v438
          %v441 = vmul.f32 %v440, 1.442695
          %v442 = vpow.pop %v441
          %v443 = vmul.f32 %v439, %v442
          %444 = vadd.xlane.f32.xlu0 %v443
          %v445 = vpop.xlane.xlu0 %444
          %v446 = vld [vmem:[#allocation4] sm:$0xff]
          %447 = vadd.xlane.f32.xlu0 %v446
          %v448 = vpop.xlane.xlu0 %447
          %v449 = vld [vmem:[#allocation5] sm:$0xff]
          %450 = vadd.xlane.f32.xlu0 %v449
          %v451 = vpop.xlane.xlu0 %450
          %v452 = vlog2.pop %v445
          %v453 = vmul.f32 %v452, 0.6931472
          %v454 = vadd.f32 %v453, %v438
          %v455 = vmax.f32 %v451, 1.0
          %v456 = vrcp.pop %v455
          %v457 = vmul.f32 %v448, %v456
          %v458 = vsub.f32 %v457, %v454
          %v459 = vmul.f32 %v458, -1.0
          %v460 = vlaneseq
          %v461 = vshrl.u32 %v460, 7
          %v462 = vstv %s365
          %v463 = vadd.s32 %v462, %v461
          %vm464 = vcmp.lt.s32.totalorder %v463, 16
          %vm465 = vcmp.gt.f32.partialorder %v451, 0.0
          %vm466 = vmand %vm464, %vm465
          %v467 = vsel %vm466, %v459, 0.0
          %vm468 = vcmask 7168
          %469 = vst.msk [vmem:[%s259] sm:$0xff] %vm468, %v467
        $region56: #{tpu_custom_call.1} parent=35 // pred_fallthru
          _
        %p470 = scmp.lt.s32.totalorder %s20, 1
        %s471 = scalar_select %p470, %s20, 1
        %s472 = smul.addr %s471, 8
        %s473 = scalar_lea.vmem %s4, %s472
        // Predicated region
        $region57: #{tpu_custom_call.1} parent=35 // pred_check
          %p474 = pneg %p150
        $region58: #{tpu_custom_call.1} parent=35 // pred_check_branch
          %476 = sbr.rel (%p474) target = $region60
        $region59: #{tpu_custom_call.1} parent=35 // pred_region
          _
        $region60: #{tpu_custom_call.1} parent=35 // pred_fallthru
          _
      $region36: #{tpu_custom_call.1} parent=5 // pred_fallthru
        _
      %p477 = scmp.le.s32.totalorder 2, %s11
      // Predicated region
      $region61: #{tpu_custom_call.1} parent=5 // pred_check
        %p478 = pneg %p477
      $region62: #{tpu_custom_call.1} parent=5 // pred_check_branch
        %480 = sbr.rel (%p478) target = $region64
      $region63: #{tpu_custom_call.1} parent=5 // pred_region
        %s481 = ssub.s32 %s11, 2
        // Predicated region
        $region65: #{tpu_custom_call.1} parent=63 // pred_check
          %p482 = pneg %p156
        $region66: #{tpu_custom_call.1} parent=63 // pred_check_branch
          %484 = sbr.rel (%p482) target = $region68
        $region67: #{tpu_custom_call.1} parent=63 // pred_region
          %p485 = scmp.lt.s32.totalorder %s22, 1
          %s486 = scalar_select %p485, %s22, 1
          %s487 = smul.addr %s486, 8
          %s488 = scalar_lea.vmem %s4, %s487
        $region68: #{tpu_custom_call.1} parent=63 // pred_fallthru
          _
      $region64: #{tpu_custom_call.1} parent=5 // pred_fallthru
        _
    $region6: #{tpu_custom_call.1} parent=1 // loop_footer
      %s15 = sadd.s32 1, %s11
    $region7: #{tpu_custom_call.1} parent=1 // loop_footer_branch
      %10 = sbr.rel target = $region3
    $region8: #{tpu_custom_call.1} parent=1 // loop_exit
      _
    %489 = vsyncpa [#allocation7], 1
    %s490 = scalar_lea.sflag [#allocation7], 1
    %491 = vsyncpa %s490, 1

</llo_original>
